<compile_context>
chip_gen: v7x
topology: tpu7x:2x2x1
jax: 0.10.0
libtpu: 0.0.40
codegen_flags: <defaults>
</compile_context>

<pallas_src>
import jax
import jax.numpy as jnp
from jax.experimental import pallas as pl
from jax.experimental.pallas import tpu as pltpu


LEAKY_ALPHA = 0.2
MASK_VALUE = -9e15


def gat_layer_kernel(x_ref, adj_ref, wcat_ref, amat_ref, o_ref):
    """One GAT layer for one batch element.  grid = (B,); heads fused inside."""
    N, D = x_ref.shape[1], x_ref.shape[2]
    H = amat_ref.shape[1] // 2

    x = x_ref[0]                        # [N, D]
    adj = adj_ref[0]                    # [N, N]
    wcat = wcat_ref[...]                # [D, H*D]   heads concatenated on lanes
    amat = amat_ref[...]                # [H*D, 2H]  block-diag [a1 | a2]

    # One lane-dense per-node transform for ALL heads (single MXU pass).
    wh_all = jnp.dot(x, wcat, preferred_element_type=jnp.float32)   # [N, H*D]

    # Attention projections for ALL heads in one MXU pass:
    #   f_all[:, h]     = sum_d Wh_h[:, d] * a1[h, d]   ("self" term)
    #   f_all[:, H + h] = sum_d Wh_h[:, d] * a2[h, d]   ("neighbor" term)
    f_all = jnp.dot(wh_all, amat, preferred_element_type=jnp.float32)  # [N, 2H]
    f1_all = f_all[:, :H]                 # [N, H]  self term, column per head
    f2t_all = f_all[:, H:].T              # [H, N]  neighbor term, row per head

    # Head-invariant additive adjacency mask, computed once per batch tile.
    neg = jnp.where(adj > 0, 0.0, MASK_VALUE)                        # [N, N]

    acc = jnp.zeros((N, D), jnp.float32)
    for h in range(H):                                               # static unroll
        wh = wh_all[:, h * D:(h + 1) * D]                            # [N, D]

        # Additive attention logits e_ij = LeakyReLU(a1.Wh_i + a2.Wh_j).
        e = f1_all[:, h:h + 1] + f2t_all[h:h + 1, :]                 # [N, N]
        e = jnp.maximum(e, LEAKY_ALPHA * e)                          # LeakyReLU
        e = e + neg                                                  # mask non-edges

        # Row-wise softmax over neighbors (denominator via EUP approx recip).
        m = jnp.max(e, axis=-1, keepdims=True)
        p = jnp.exp(e - m)
        attn = p * pl.reciprocal(jnp.sum(p, axis=-1, keepdims=True), approx=True)

        # Aggregate neighbor features (MXU) and accumulate over heads.
        acc = acc + jnp.dot(attn, wh, preferred_element_type=jnp.float32)

    avg = acc * (1.0 / H)                                            # head average
    # ELU; clamp exp argument so the discarded branch never overflows.
    out = jnp.where(avg > 0, avg, jnp.exp(jnp.minimum(avg, 0.0)) - 1.0)
    o_ref[0] = out.astype(o_ref.dtype)


@jax.jit
def gat_layer(x, adj, w, a1, a2):
    B, N, D = x.shape
    H = w.shape[0]

    # Heads concatenated on the lane axis: W_cat[:, h*D:(h+1)*D] == W[h].
    w_cat = jnp.transpose(w, (1, 0, 2)).reshape(D, H * D)

    # Block-diagonal attention-projection matrix [H*D, 2H]:
    #   a_mat[h*D + d, h]     = a1[h, d]
    #   a_mat[h*D + d, H + h] = a2[h, d]
    eye = jnp.eye(H, dtype=x.dtype)                                  # [H, H]
    a1_blk = (a1.reshape(H, D)[:, :, None] * eye[:, None, :]).reshape(H * D, H)
    a2_blk = (a2.reshape(H, D)[:, :, None] * eye[:, None, :]).reshape(H * D, H)
    a_mat = jnp.concatenate([a1_blk, a2_blk], axis=1)                # [H*D, 2H]

    return pl.pallas_call(
        gat_layer_kernel,
        out_shape=jax.ShapeDtypeStruct((B, N, D), x.dtype),
        grid_spec=pltpu.PrefetchScalarGridSpec(
            num_scalar_prefetch=0,
            grid=(B,),
            in_specs=[
                pl.BlockSpec((1, N, D), lambda b: (b, 0, 0)),      # x
                pl.BlockSpec((1, N, N), lambda b: (b, 0, 0)),      # adj
                pl.BlockSpec((D, H * D), lambda b: (0, 0)),        # W_cat (shared)
                pl.BlockSpec((H * D, 2 * H), lambda b: (0, 0)),    # a_mat (shared)
            ],
            out_specs=pl.BlockSpec((1, N, D), lambda b: (b, 0, 0)),
        ),
        compiler_params=pltpu.CompilerParams(
            dimension_semantics=("parallel",)),
    )(x, adj, w_cat, a_mat)


def stacked_gats_forward(x, adj, params):
    """Faithful to the PyTorch loop: `x` is never re-assigned, so every layer
    reads the ORIGINAL x and only the LAST layer's output is returned.
    Earlier layers are dead compute -> skip them (bit-identical result)."""
    if not params:
        raise ValueError("StackedGATs requires at least one layer")
    w, a1, a2 = params[-1]
    return gat_layer(x, adj, w, a1, a2)


# ---------------------------------------------------------------- reference --
def _gat_layer_ref(x, adj, w, a1, a2):
    # x:[B,N,D] adj:[B,N,N] w:[H,D,D] a1,a2:[H,1,D]
    wh = jnp.einsum("bnd,hde->bhne", x, w)                           # [B,H,N,D]
    f1 = jnp.sum(wh * a1[None], axis=-1, keepdims=True)             # [B,H,N,1]
    f2 = jnp.sum(wh * a2[None], axis=-1, keepdims=True)             # [B,H,N,1]
    e = f1 + jnp.swapaxes(f2, -1, -2)                                # [B,H,N,N]
    e = jnp.where(e > 0, e, LEAKY_ALPHA * e)
    e = jnp.where(adj[:, None] > 0, e, MASK_VALUE)
    attn = jax.nn.softmax(e, axis=-1)
    out = jnp.einsum("bhnm,bhmd->bhnd", attn, wh)                    # [B,H,N,D]
    avg = jnp.mean(out, axis=1)                                      # [B,N,D]
    return jnp.where(avg > 0, avg, jnp.exp(avg) - 1.0)


def _stacked_ref(x, adj, params):
    out = None
    for (w, a1, a2) in params:
        out = _gat_layer_ref(x, adj, w, a1, a2)
    return out


# --------------------------------------------------------------------- main --
if __name__ == "__main__":
    B, N, D, H, L = 2, 16, 32, 4, 2   # batch, nodes, hidden_dim, nheads, layers

    key = jax.random.PRNGKey(0)
    kx, kadj, *kp = jax.random.split(key, 2 + 3 * L)

    x = jax.random.normal(kx, (B, N, D), dtype=jnp.float32)

    # Random adjacency with guaranteed self-loops.
    adj = (jax.random.uniform(kadj, (B, N, N)) > 0.5).astype(jnp.float32)
    adj = jnp.maximum(adj, jnp.eye(N, dtype=jnp.float32)[None])

    # Deterministic per-layer, per-head parameters.
    params = []
    for l in range(L):
        w = 0.1 * jax.random.normal(kp[3 * l + 0], (H, D, D), dtype=jnp.float32)
        a1 = 0.1 * jax.random.normal(kp[3 * l + 1], (H, 1, D), dtype=jnp.float32)
        a2 = 0.1 * jax.random.normal(kp[3 * l + 2], (H, 1, D), dtype=jnp.float32)
        params.append((w, a1, a2))

    out = stacked_gats_forward(x, adj, params)
    out = jax.block_until_ready(out)

    ref = _stacked_ref(x, adj, params)
    assert out.shape == (B, N, D), out.shape
    assert bool(jnp.all(jnp.isfinite(out)))
    # Tolerance accounts for the EUP approx reciprocal in the softmax denom.
    assert bool(jnp.allclose(out, ref, rtol=1e-3, atol=2e-3)), "mismatch vs reference"

    print("KERNEL_OK")
</pallas_src>

<mosaic_0001>
module attributes {stable_mosaic.version = 11 : i64} {
  func.func @gat_layer_kernel(%arg0: i32, %arg1: memref<1x16x32xf32, #tpu.memory_space<vmem>>, %arg2: memref<1x16x16xf32, #tpu.memory_space<vmem>>, %arg3: memref<32x128xf32, #tpu.memory_space<vmem>>, %arg4: memref<128x8xf32, #tpu.memory_space<vmem>>, %arg5: memref<1x16x32xf32, #tpu.memory_space<vmem>>) attributes {dimension_semantics = [#tpu.dimension_semantics<parallel>], iteration_bounds = array<i64: 2>, scalar_prefetch = 0 : i64, scratch_operands = 0 : i64, tpu.core_type = #tpu.core_type<tc>, window_params = [{transform_indices = @transform_0, window_bounds = array<i64: 1, 16, 32>}, {transform_indices = @transform_1, window_bounds = array<i64: 1, 16, 16>}, {pipeline_mode = #tpu.pipeline_mode<synchronous>, transform_indices = @transform_2, window_bounds = array<i64: 32, 128>}, {pipeline_mode = #tpu.pipeline_mode<synchronous>, transform_indices = @transform_3, window_bounds = array<i64: 128, 8>}, {transform_indices = @transform_4, window_bounds = array<i64: 1, 16, 32>}]} {
    %c0 = arith.constant 0 : index
    %c0_0 = arith.constant 0 : index
    %c0_1 = arith.constant 0 : index
    %0 = vector.load %arg1[%c0, %c0_0, %c0_1] : memref<1x16x32xf32, #tpu.memory_space<vmem>>, vector<1x16x32xf32>
    %1 = vector.shape_cast %0 : vector<1x16x32xf32> to vector<16x32xf32>
    %c0_2 = arith.constant 0 : index
    %c0_3 = arith.constant 0 : index
    %c0_4 = arith.constant 0 : index
    %2 = vector.load %arg2[%c0_2, %c0_3, %c0_4] : memref<1x16x16xf32, #tpu.memory_space<vmem>>, vector<1x16x16xf32>
    %3 = vector.shape_cast %2 : vector<1x16x16xf32> to vector<16x16xf32>
    %c0_5 = arith.constant 0 : index
    %c0_6 = arith.constant 0 : index
    %4 = vector.load %arg3[%c0_5, %c0_6] : memref<32x128xf32, #tpu.memory_space<vmem>>, vector<32x128xf32>
    %c0_7 = arith.constant 0 : index
    %c0_8 = arith.constant 0 : index
    %5 = vector.load %arg4[%c0_7, %c0_8] : memref<128x8xf32, #tpu.memory_space<vmem>>, vector<128x8xf32>
    %cst = arith.constant dense<0.000000e+00> : vector<16x128xf32>
    %6 = tpu.matmul %1, %4, %cst {dimension_numbers = #tpu.dot_dimension_numbers<[1], [0], [0], [1], [0, 0, 1, 1], [], []>} : vector<16x32xf32>, vector<32x128xf32>, vector<16x128xf32> -> vector<16x128xf32>
    %cst_9 = arith.constant dense<0.000000e+00> : vector<16x8xf32>
    %7 = tpu.matmul %6, %5, %cst_9 {dimension_numbers = #tpu.dot_dimension_numbers<[1], [0], [0], [1], [0, 0, 1, 1], [], []>} : vector<16x128xf32>, vector<128x8xf32>, vector<16x8xf32> -> vector<16x8xf32>
    %8 = vector.extract_strided_slice %7 {offsets = [0, 0], sizes = [16, 4], strides = [1, 1]} : vector<16x8xf32> to vector<16x4xf32>
    %9 = vector.extract_strided_slice %7 {offsets = [0, 4], sizes = [16, 4], strides = [1, 1]} : vector<16x8xf32> to vector<16x4xf32>
    %10 = tpu.transpose %9, [1, 0] : vector<16x4xf32> -> vector<4x16xf32>
    %cst_10 = arith.constant 0.000000e+00 : f32
    %11 = vector.broadcast %cst_10 : f32 to vector<16x16xf32>
    %12 = arith.cmpf ogt, %3, %11 : vector<16x16xf32>
    %cst_11 = arith.constant 0.000000e+00 : f32
    %cst_12 = arith.constant -9.000000e+15 : f32
    %13 = vector.broadcast %cst_11 : f32 to vector<16x16xf32>
    %14 = vector.broadcast %cst_12 : f32 to vector<16x16xf32>
    %15 = arith.select %12, %13, %14 : vector<16x16xi1>, vector<16x16xf32>
    %cst_13 = arith.constant 0.000000e+00 : f32
    %16 = vector.broadcast %cst_13 : f32 to vector<16x32xf32>
    %17 = vector.extract_strided_slice %6 {offsets = [0, 0], sizes = [16, 32], strides = [1, 1]} : vector<16x128xf32> to vector<16x32xf32>
    %18 = vector.extract_strided_slice %8 {offsets = [0, 0], sizes = [16, 1], strides = [1, 1]} : vector<16x4xf32> to vector<16x1xf32>
    %19 = vector.extract_strided_slice %10 {offsets = [0, 0], sizes = [1, 16], strides = [1, 1]} : vector<4x16xf32> to vector<1x16xf32>
    %20 = vector.broadcast %18 : vector<16x1xf32> to vector<16x16xf32>
    %21 = vector.broadcast %19 : vector<1x16xf32> to vector<16x16xf32>
    %22 = arith.addf %20, %21 : vector<16x16xf32>
    %cst_14 = arith.constant 2.000000e-01 : f32
    %23 = vector.broadcast %cst_14 : f32 to vector<16x16xf32>
    %24 = arith.mulf %23, %22 : vector<16x16xf32>
    %25 = arith.maximumf %22, %24 : vector<16x16xf32>
    %26 = arith.addf %25, %15 : vector<16x16xf32>
    %cst_15 = arith.constant dense<0xFF800000> : vector<16xf32>
    %27 = vector.multi_reduction <maximumf>, %26, %cst_15 [1] : vector<16x16xf32> to vector<16xf32>
    %28 = vector.shape_cast %27 : vector<16xf32> to vector<16x1xf32>
    %29 = vector.broadcast %28 : vector<16x1xf32> to vector<16x16xf32>
    %30 = arith.subf %26, %29 : vector<16x16xf32>
    %31 = math.exp %30 : vector<16x16xf32>
    %cst_16 = arith.constant dense<0.000000e+00> : vector<16xf32>
    %32 = vector.multi_reduction <add>, %31, %cst_16 [1] : vector<16x16xf32> to vector<16xf32>
    %33 = vector.shape_cast %32 : vector<16xf32> to vector<16x1xf32>
    %34 = tpu.reciprocal %33 {approx = true} : vector<16x1xf32> -> vector<16x1xf32>
    %35 = vector.broadcast %34 : vector<16x1xf32> to vector<16x16xf32>
    %36 = arith.mulf %31, %35 : vector<16x16xf32>
    %cst_17 = arith.constant dense<0.000000e+00> : vector<16x32xf32>
    %37 = tpu.matmul %36, %17, %cst_17 {dimension_numbers = #tpu.dot_dimension_numbers<[1], [0], [0], [1], [0, 0, 1, 1], [], []>} : vector<16x16xf32>, vector<16x32xf32>, vector<16x32xf32> -> vector<16x32xf32>
    %38 = arith.addf %16, %37 : vector<16x32xf32>
    %39 = vector.extract_strided_slice %6 {offsets = [0, 32], sizes = [16, 32], strides = [1, 1]} : vector<16x128xf32> to vector<16x32xf32>
    %40 = vector.extract_strided_slice %8 {offsets = [0, 1], sizes = [16, 1], strides = [1, 1]} : vector<16x4xf32> to vector<16x1xf32>
    %41 = vector.extract_strided_slice %10 {offsets = [1, 0], sizes = [1, 16], strides = [1, 1]} : vector<4x16xf32> to vector<1x16xf32>
    %42 = vector.broadcast %40 : vector<16x1xf32> to vector<16x16xf32>
    %43 = vector.broadcast %41 : vector<1x16xf32> to vector<16x16xf32>
    %44 = arith.addf %42, %43 : vector<16x16xf32>
    %cst_18 = arith.constant 2.000000e-01 : f32
    %45 = vector.broadcast %cst_18 : f32 to vector<16x16xf32>
    %46 = arith.mulf %45, %44 : vector<16x16xf32>
    %47 = arith.maximumf %44, %46 : vector<16x16xf32>
    %48 = arith.addf %47, %15 : vector<16x16xf32>
    %cst_19 = arith.constant dense<0xFF800000> : vector<16xf32>
    %49 = vector.multi_reduction <maximumf>, %48, %cst_19 [1] : vector<16x16xf32> to vector<16xf32>
    %50 = vector.shape_cast %49 : vector<16xf32> to vector<16x1xf32>
    %51 = vector.broadcast %50 : vector<16x1xf32> to vector<16x16xf32>
    %52 = arith.subf %48, %51 : vector<16x16xf32>
    %53 = math.exp %52 : vector<16x16xf32>
    %cst_20 = arith.constant dense<0.000000e+00> : vector<16xf32>
    %54 = vector.multi_reduction <add>, %53, %cst_20 [1] : vector<16x16xf32> to vector<16xf32>
    %55 = vector.shape_cast %54 : vector<16xf32> to vector<16x1xf32>
    %56 = tpu.reciprocal %55 {approx = true} : vector<16x1xf32> -> vector<16x1xf32>
    %57 = vector.broadcast %56 : vector<16x1xf32> to vector<16x16xf32>
    %58 = arith.mulf %53, %57 : vector<16x16xf32>
    %cst_21 = arith.constant dense<0.000000e+00> : vector<16x32xf32>
    %59 = tpu.matmul %58, %39, %cst_21 {dimension_numbers = #tpu.dot_dimension_numbers<[1], [0], [0], [1], [0, 0, 1, 1], [], []>} : vector<16x16xf32>, vector<16x32xf32>, vector<16x32xf32> -> vector<16x32xf32>
    %60 = arith.addf %38, %59 : vector<16x32xf32>
    %61 = vector.extract_strided_slice %6 {offsets = [0, 64], sizes = [16, 32], strides = [1, 1]} : vector<16x128xf32> to vector<16x32xf32>
    %62 = vector.extract_strided_slice %8 {offsets = [0, 2], sizes = [16, 1], strides = [1, 1]} : vector<16x4xf32> to vector<16x1xf32>
    %63 = vector.extract_strided_slice %10 {offsets = [2, 0], sizes = [1, 16], strides = [1, 1]} : vector<4x16xf32> to vector<1x16xf32>
    %64 = vector.broadcast %62 : vector<16x1xf32> to vector<16x16xf32>
    %65 = vector.broadcast %63 : vector<1x16xf32> to vector<16x16xf32>
    %66 = arith.addf %64, %65 : vector<16x16xf32>
    %cst_22 = arith.constant 2.000000e-01 : f32
    %67 = vector.broadcast %cst_22 : f32 to vector<16x16xf32>
    %68 = arith.mulf %67, %66 : vector<16x16xf32>
    %69 = arith.maximumf %66, %68 : vector<16x16xf32>
    %70 = arith.addf %69, %15 : vector<16x16xf32>
    %cst_23 = arith.constant dense<0xFF800000> : vector<16xf32>
    %71 = vector.multi_reduction <maximumf>, %70, %cst_23 [1] : vector<16x16xf32> to vector<16xf32>
    %72 = vector.shape_cast %71 : vector<16xf32> to vector<16x1xf32>
    %73 = vector.broadcast %72 : vector<16x1xf32> to vector<16x16xf32>
    %74 = arith.subf %70, %73 : vector<16x16xf32>
    %75 = math.exp %74 : vector<16x16xf32>
    %cst_24 = arith.constant dense<0.000000e+00> : vector<16xf32>
    %76 = vector.multi_reduction <add>, %75, %cst_24 [1] : vector<16x16xf32> to vector<16xf32>
    %77 = vector.shape_cast %76 : vector<16xf32> to vector<16x1xf32>
    %78 = tpu.reciprocal %77 {approx = true} : vector<16x1xf32> -> vector<16x1xf32>
    %79 = vector.broadcast %78 : vector<16x1xf32> to vector<16x16xf32>
    %80 = arith.mulf %75, %79 : vector<16x16xf32>
    %cst_25 = arith.constant dense<0.000000e+00> : vector<16x32xf32>
    %81 = tpu.matmul %80, %61, %cst_25 {dimension_numbers = #tpu.dot_dimension_numbers<[1], [0], [0], [1], [0, 0, 1, 1], [], []>} : vector<16x16xf32>, vector<16x32xf32>, vector<16x32xf32> -> vector<16x32xf32>
    %82 = arith.addf %60, %81 : vector<16x32xf32>
    %83 = vector.extract_strided_slice %6 {offsets = [0, 96], sizes = [16, 32], strides = [1, 1]} : vector<16x128xf32> to vector<16x32xf32>
    %84 = vector.extract_strided_slice %8 {offsets = [0, 3], sizes = [16, 1], strides = [1, 1]} : vector<16x4xf32> to vector<16x1xf32>
    %85 = vector.extract_strided_slice %10 {offsets = [3, 0], sizes = [1, 16], strides = [1, 1]} : vector<4x16xf32> to vector<1x16xf32>
    %86 = vector.broadcast %84 : vector<16x1xf32> to vector<16x16xf32>
    %87 = vector.broadcast %85 : vector<1x16xf32> to vector<16x16xf32>
    %88 = arith.addf %86, %87 : vector<16x16xf32>
    %cst_26 = arith.constant 2.000000e-01 : f32
    %89 = vector.broadcast %cst_26 : f32 to vector<16x16xf32>
    %90 = arith.mulf %89, %88 : vector<16x16xf32>
    %91 = arith.maximumf %88, %90 : vector<16x16xf32>
    %92 = arith.addf %91, %15 : vector<16x16xf32>
    %cst_27 = arith.constant dense<0xFF800000> : vector<16xf32>
    %93 = vector.multi_reduction <maximumf>, %92, %cst_27 [1] : vector<16x16xf32> to vector<16xf32>
    %94 = vector.shape_cast %93 : vector<16xf32> to vector<16x1xf32>
    %95 = vector.broadcast %94 : vector<16x1xf32> to vector<16x16xf32>
    %96 = arith.subf %92, %95 : vector<16x16xf32>
    %97 = math.exp %96 : vector<16x16xf32>
    %cst_28 = arith.constant dense<0.000000e+00> : vector<16xf32>
    %98 = vector.multi_reduction <add>, %97, %cst_28 [1] : vector<16x16xf32> to vector<16xf32>
    %99 = vector.shape_cast %98 : vector<16xf32> to vector<16x1xf32>
    %100 = tpu.reciprocal %99 {approx = true} : vector<16x1xf32> -> vector<16x1xf32>
    %101 = vector.broadcast %100 : vector<16x1xf32> to vector<16x16xf32>
    %102 = arith.mulf %97, %101 : vector<16x16xf32>
    %cst_29 = arith.constant dense<0.000000e+00> : vector<16x32xf32>
    %103 = tpu.matmul %102, %83, %cst_29 {dimension_numbers = #tpu.dot_dimension_numbers<[1], [0], [0], [1], [0, 0, 1, 1], [], []>} : vector<16x16xf32>, vector<16x32xf32>, vector<16x32xf32> -> vector<16x32xf32>
    %104 = arith.addf %82, %103 : vector<16x32xf32>
    %cst_30 = arith.constant 2.500000e-01 : f32
    %105 = vector.broadcast %cst_30 : f32 to vector<16x32xf32>
    %106 = arith.mulf %104, %105 : vector<16x32xf32>
    %cst_31 = arith.constant 0.000000e+00 : f32
    %107 = vector.broadcast %cst_31 : f32 to vector<16x32xf32>
    %108 = arith.cmpf ogt, %106, %107 : vector<16x32xf32>
    %cst_32 = arith.constant 0.000000e+00 : f32
    %109 = vector.broadcast %cst_32 : f32 to vector<16x32xf32>
    %110 = arith.minimumf %106, %109 : vector<16x32xf32>
    %111 = math.exp %110 : vector<16x32xf32>
    %cst_33 = arith.constant 1.000000e+00 : f32
    %112 = vector.broadcast %cst_33 : f32 to vector<16x32xf32>
    %113 = arith.subf %111, %112 : vector<16x32xf32>
    %114 = arith.select %108, %106, %113 : vector<16x32xi1>, vector<16x32xf32>
    %c0_34 = arith.constant 0 : index
    %c0_35 = arith.constant 0 : index
    %c0_36 = arith.constant 0 : index
    %115 = vector.load %arg5[%c0_34, %c0_35, %c0_36] : memref<1x16x32xf32, #tpu.memory_space<vmem>>, vector<1x16x32xf32>
    %116 = vector.shape_cast %115 : vector<1x16x32xf32> to vector<16x32xf32>
    %117 = vector.shape_cast %114 : vector<16x32xf32> to vector<1x16x32xf32>
    tpu.vector_store %arg5[%c0_34, %c0_35, %c0_36], %117 {strides = array<i32>} : memref<1x16x32xf32, #tpu.memory_space<vmem>>, vector<1x16x32xf32>,
    return
  }
  func.func @transform_0(%arg0: i32) -> (i32, i32, i32) {
    %c0_i32 = arith.constant 0 : i32
    %c0_i32_0 = arith.constant 0 : i32
    %c0_i32_1 = arith.constant 0 : i32
    return %arg0, %c0_i32, %c0_i32_0 : i32, i32, i32
  }
  func.func @transform_1(%arg0: i32) -> (i32, i32, i32) {
    %c0_i32 = arith.constant 0 : i32
    %c0_i32_0 = arith.constant 0 : i32
    %c0_i32_1 = arith.constant 0 : i32
    return %arg0, %c0_i32, %c0_i32_0 : i32, i32, i32
  }
  func.func @transform_2(%arg0: i32) -> (i32, i32) {
    %c0_i32 = arith.constant 0 : i32
    %c0_i32_0 = arith.constant 0 : i32
    %c0_i32_1 = arith.constant 0 : i32
    return %c0_i32, %c0_i32_0 : i32, i32
  }
  func.func @transform_3(%arg0: i32) -> (i32, i32) {
    %c0_i32 = arith.constant 0 : i32
    %c0_i32_0 = arith.constant 0 : i32
    %c0_i32_1 = arith.constant 0 : i32
    return %c0_i32, %c0_i32_0 : i32, i32
  }
  func.func @transform_4(%arg0: i32) -> (i32, i32, i32) {
    %c0_i32 = arith.constant 0 : i32
    %c0_i32_0 = arith.constant 0 : i32
    %c0_i32_1 = arith.constant 0 : i32
    return %arg0, %c0_i32, %c0_i32_0 : i32, i32, i32
  }
}

</mosaic_0001>

<llo_original>
// kernel: gat_layer.1
$region0: #{gat_layer.1}
  #allocation0 [shape = 'u32[]', space=smem, size = 0x4, offset = 0x4, fixed_abs, tag = 'smem constant byte address 0x4 - core index']
  #allocation1 [shape = 'u32[144,128]{1,0:T(1,128)}', space=vmem, size = 0x12000, scoped, tag = 'internal scratch']
  %s0 = inlined_call_operand.vmem [shape: f32[2,16,32], index: 0, kind: input, shape index: {}]
  %s1 = inlined_call_operand.vmem [shape: f32[2,16,16], index: 1, kind: input, shape index: {}]
  %s2 = inlined_call_operand.vmem [shape: f32[32,128], index: 2, kind: input, shape index: {}]
  %s3 = inlined_call_operand.vmem [shape: f32[128,8], index: 3, kind: input, shape index: {}]
  %s4 = inlined_call_operand.hbm [shape: f32[2,16,32], index: 4, kind: output, shape index: {}]
  %s5 = sld [smem:[#allocation0]]
  $region49: #{gat_layer.1} parent=0
    _
  %s7 = ssub.s32 1, %s5
  %s8 = scalar_select 0, %s7, %s5
  $region1: #{gat_layer.1} parent=0
    #allocation2 [shape = 'u8[16384]{0}', space=vmem, size = 0x4000, scoped, tag = 'output window, operand 0']
    #allocation3 [shape = 's32[2]{0}', space=sflag, size = 0x8, scoped, tag = 'scoped memory for gat_layer.1']
    %9 = vsyncpa [#allocation3], 0
    %s10 = scalar_lea.sflag [#allocation3], 1
    %11 = vsyncpa %s10, 0
    loop: start=0, step=1, limit=4
    $region2: #{gat_layer.1} parent=1 // loop_pre_header
      _
    $region3: #{gat_layer.1} parent=1 // loop_header
      %s13 = sphi 0, %s17
      %p14 = scmp.ge.s32.totalorder %s13, 4
      %s23 = sphi 0, %s25
      %s26 = sphi 0, %s23
      %s27 = sphi 0, %s26
      %s43 = sphi 0, %s27
      %s49 = sphi 0, %s51
      %s52 = sphi 0, %s49
      %s53 = sphi 0, %s52
      %s69 = sphi 0, %s53
      %s73 = sphi 0, %s73
      %s75 = sphi 0, %s73
      %s76 = sphi 0, %s75
      %s90 = sphi 0, %s76
      %s94 = sphi 0, %s94
      %s96 = sphi 0, %s94
      %s97 = sphi 0, %s96
      %s111 = sphi 0, %s97
      %s117 = sphi 0, %s119
      %s120 = sphi 0, %s117
      %s121 = sphi 0, %s120
      %s137 = sphi 0, %s121
    $region4: #{gat_layer.1} parent=1 // loop_header_branch
      %16 = sbr.rel (%p14) target = $region8
    $region5: #{gat_layer.1} parent=1 // loop_body
      %s18 = ssub.s32 %s13, 1
      %s19 = ssub.s32 %s13, 2
      %s20 = sadd.s32 %s13, 1
      %s21 = ssub.s32 %s13, %s20
      %p22 = scmp.eq.s32.totalorder %s21, 0
      %s24 = sadd.s32 %s23, 1
      %s25 = scalar_select %p22, %s23, %s24
      %p28 = pneg %p22
      %p29 = scmp.eq.s32.totalorder %s13, 1
      %p30 = por %p28, %p29
      %p31 = scmp.ne.s32.totalorder %s23, %s26
      %p32 = scmp.eq.s32.totalorder %s13, 0
      %p33 = por %p31, %p32
      %p34 = scmp.ne.s32.totalorder %s23, %s26
      %p35 = scmp.eq.s32.totalorder %s18, 1
      %p36 = por %p34, %p35
      %p37 = scmp.ne.s32.totalorder %s26, %s27
      %p38 = scmp.eq.s32.totalorder %s18, 0
      %p39 = por %p37, %p38
      %p40 = scmp.ne.s32.totalorder %s26, %s27
      %p41 = scmp.eq.s32.totalorder %s19, 1
      %p42 = por %p40, %p41
      %p44 = scmp.ne.s32.totalorder %s27, %s43
      %p45 = scmp.eq.s32.totalorder %s19, 0
      %p46 = por %p44, %p45
      %s47 = ssub.s32 %s13, %s20
      %p48 = scmp.eq.s32.totalorder %s47, 0
      %s50 = sadd.s32 %s49, 1
      %s51 = scalar_select %p48, %s49, %s50
      %p54 = pneg %p48
      %p55 = scmp.eq.s32.totalorder %s13, 1
      %p56 = por %p54, %p55
      %p57 = scmp.ne.s32.totalorder %s49, %s52
      %p58 = scmp.eq.s32.totalorder %s13, 0
      %p59 = por %p57, %p58
      %p60 = scmp.ne.s32.totalorder %s49, %s52
      %p61 = scmp.eq.s32.totalorder %s18, 1
      %p62 = por %p60, %p61
      %p63 = scmp.ne.s32.totalorder %s52, %s53
      %p64 = scmp.eq.s32.totalorder %s18, 0
      %p65 = por %p63, %p64
      %p66 = scmp.ne.s32.totalorder %s52, %s53
      %p67 = scmp.eq.s32.totalorder %s19, 1
      %p68 = por %p66, %p67
      %p70 = scmp.ne.s32.totalorder %s53, %s69
      %p71 = scmp.eq.s32.totalorder %s19, 0
      %p72 = por %p70, %p71
      %s74 = sadd.s32 %s73, 1
      %p77 = scmp.eq.s32.totalorder %s13, 1
      %p78 = scmp.ne.s32.totalorder %s73, %s75
      %p79 = scmp.eq.s32.totalorder %s13, 0
      %p80 = por %p78, %p79
      %p81 = scmp.ne.s32.totalorder %s73, %s75
      %p82 = scmp.eq.s32.totalorder %s18, 1
      %p83 = por %p81, %p82
      %p84 = scmp.ne.s32.totalorder %s75, %s76
      %p85 = scmp.eq.s32.totalorder %s18, 0
      %p86 = por %p84, %p85
      %p87 = scmp.ne.s32.totalorder %s75, %s76
      %p88 = scmp.eq.s32.totalorder %s19, 1
      %p89 = por %p87, %p88
      %p91 = scmp.ne.s32.totalorder %s76, %s90
      %p92 = scmp.eq.s32.totalorder %s19, 0
      %p93 = por %p91, %p92
      %s95 = sadd.s32 %s94, 1
      %p98 = scmp.eq.s32.totalorder %s13, 1
      %p99 = scmp.ne.s32.totalorder %s94, %s96
      %p100 = scmp.eq.s32.totalorder %s13, 0
      %p101 = por %p99, %p100
      %p102 = scmp.ne.s32.totalorder %s94, %s96
      %p103 = scmp.eq.s32.totalorder %s18, 1
      %p104 = por %p102, %p103
      %p105 = scmp.ne.s32.totalorder %s96, %s97
      %p106 = scmp.eq.s32.totalorder %s18, 0
      %p107 = por %p105, %p106
      %p108 = scmp.ne.s32.totalorder %s96, %s97
      %p109 = scmp.eq.s32.totalorder %s19, 1
      %p110 = por %p108, %p109
      %p112 = scmp.ne.s32.totalorder %s97, %s111
      %p113 = scmp.eq.s32.totalorder %s19, 0
      %p114 = por %p112, %p113
      %s115 = ssub.s32 %s13, %s20
      %p116 = scmp.eq.s32.totalorder %s115, 0
      %s118 = sadd.s32 %s117, 1
      %s119 = scalar_select %p116, %s117, %s118
      %p122 = pneg %p116
      %p123 = scmp.eq.s32.totalorder %s13, 1
      %p124 = por %p122, %p123
      %p125 = scmp.ne.s32.totalorder %s117, %s120
      %p126 = scmp.eq.s32.totalorder %s13, 0
      %p127 = por %p125, %p126
      %p128 = scmp.ne.s32.totalorder %s117, %s120
      %p129 = scmp.eq.s32.totalorder %s18, 1
      %p130 = por %p128, %p129
      %p131 = scmp.ne.s32.totalorder %s120, %s121
      %p132 = scmp.eq.s32.totalorder %s18, 0
      %p133 = por %p131, %p132
      %p134 = scmp.ne.s32.totalorder %s120, %s121
      %p135 = scmp.eq.s32.totalorder %s19, 1
      %p136 = por %p134, %p135
      %p138 = scmp.ne.s32.totalorder %s121, %s137
      %p139 = scmp.eq.s32.totalorder %s19, 0
      %p140 = por %p138, %p139
      %p141 = scmp.le.s32.totalorder 1, %s13
      %p142 = scmp.lt.s32.totalorder %s13, 3
      %p143 = pnand %p141, %p142
      %p144 = pneg %p143
      // Predicated region
      $region9: #{gat_layer.1} parent=5 // pred_check
        _
      $region10: #{gat_layer.1} parent=5 // pred_check_branch
        %146 = sbr.rel (%p143) target = $region12
      $region11: #{gat_layer.1} parent=5 // pred_region
        %s147 = ssub.s32 %s13, 1
        // Predicated region
        $region13: #{gat_layer.1} parent=11 // pred_check
          %p148 = pneg %p86
        $region14: #{gat_layer.1} parent=11 // pred_check_branch
          %150 = sbr.rel (%p148) target = $region16
        $region15: #{gat_layer.1} parent=11 // pred_region
          _
        $region16: #{gat_layer.1} parent=11 // pred_fallthru
          _
        // Predicated region
        $region17: #{gat_layer.1} parent=11 // pred_check
          %p151 = pneg %p107
        $region18: #{gat_layer.1} parent=11 // pred_check_branch
          %153 = sbr.rel (%p151) target = $region20
        $region19: #{gat_layer.1} parent=11 // pred_region
          _
        $region20: #{gat_layer.1} parent=11 // pred_fallthru
          _
      $region12: #{gat_layer.1} parent=5 // pred_fallthru
        _
      %p154 = scmp.lt.s32.totalorder %s13, 2
      // Predicated region
      $region21: #{gat_layer.1} parent=5 // pred_check
        %p155 = pneg %p154
      $region22: #{gat_layer.1} parent=5 // pred_check_branch
        %157 = sbr.rel (%p155) target = $region24
      $region23: #{gat_layer.1} parent=5 // pred_region
        // Predicated region
        $region25: #{gat_layer.1} parent=23 // pred_check
          %p158 = pneg %p33
        $region26: #{gat_layer.1} parent=23 // pred_check_branch
          %160 = sbr.rel (%p158) target = $region28
        $region27: #{gat_layer.1} parent=23 // pred_region
          %p161 = scmp.lt.s32.totalorder %s13, 1
          %s162 = scalar_select %p161, %s13, 1
          %s163 = smul.addr %s162, 2
          %s164 = smul.addr %s163, 8
          %s165 = scalar_lea.vmem %s0, %s164
        $region28: #{gat_layer.1} parent=23 // pred_fallthru
          _
        // Predicated region
        $region29: #{gat_layer.1} parent=23 // pred_check
          %p166 = pneg %p59
        $region30: #{gat_layer.1} parent=23 // pred_check_branch
          %168 = sbr.rel (%p166) target = $region32
        $region31: #{gat_layer.1} parent=23 // pred_region
          %p169 = scmp.lt.s32.totalorder %s13, 1
          %s170 = scalar_select %p169, %s13, 1
          %s171 = smul.addr %s170, 2
          %s172 = smul.addr %s171, 8
          %s173 = scalar_lea.vmem %s1, %s172
        $region32: #{gat_layer.1} parent=23 // pred_fallthru
          _
      $region24: #{gat_layer.1} parent=5 // pred_fallthru
        _
      %p174 = scmp.le.s32.totalorder 1, %s13
      %p175 = scmp.lt.s32.totalorder %s13, 3
      %p176 = pnand %p174, %p175
      %p177 = pneg %p176
      // Predicated region
      $region33: #{gat_layer.1} parent=5 // pred_check
        _
      $region34: #{gat_layer.1} parent=5 // pred_check_branch
        %179 = sbr.rel (%p176) target = $region36
      $region35: #{gat_layer.1} parent=5 // pred_region
        %s180 = ssub.s32 %s13, 1
        %p181 = scmp.lt.s32.totalorder %s18, 1
        %s182 = scalar_select %p181, %s18, 1
        %s183 = smul.addr %s182, 2
        %s184 = smul.addr %s183, 8
        %s185 = scalar_lea.vmem %s0, %s184
        %p186 = pneg %p39
        %p187 = pneg %p36
        %p188 = scmp.lt.s32.totalorder %s18, 1
        %s189 = scalar_select %p188, %s18, 1
        %s190 = smul.addr %s189, 2
        %s191 = smul.addr %s190, 8
        %s192 = scalar_lea.vmem %s1, %s191
        %p193 = pneg %p65
        %p194 = pneg %p62
        %p195 = pneg %p86
        %p196 = pneg %p83
        %p197 = pneg %p107
        %p198 = pneg %p104
        %p199 = pneg %p133
        %p200 = pneg %p130
        %s201 = sand.u32 %s120, 1
        %s202 = scalar_lea.sflag [#allocation3], %s201
        %s203 = sand.u32 %s120, 1
        %s204 = smul.addr %s203, 16
        %s205 = scalar_lea.vmem [#allocation2], %s204
        %p206 = scmp.lt.s32.totalorder %s18, 1
        %s207 = scalar_select %p206, %s18, 1
        %s208 = smul.addr %s207, 2
        %s209 = smul.addr %s208, 8
        %s210 = scalar_lea.vmem %s0, %s209
        %p211 = scmp.lt.s32.totalorder %s18, 1
        %s212 = scalar_select %p211, %s18, 1
        %s213 = smul.addr %s212, 2
        %s214 = smul.addr %s213, 8
        %s215 = scalar_lea.vmem %s1, %s214
        %v216 = vld [vmem:[%s210] sm:$0xff]
        %v217 = vld [vmem:[%s210 + $0x8] sm:$0xff]
        %v218 = vld [vmem:[%s215] sm:$0xff]
        %v219 = vld [vmem:[%s215 + $0x8] sm:$0xff]
        %v220 = vld [vmem:[%s2] sm:$0xff]
        %v221 = vld [vmem:[%s2 + $0x8] sm:$0xff]
        %v222 = vld [vmem:[%s2 + $0x10] sm:$0xff]
        %v223 = vld [vmem:[%s2 + $0x18] sm:$0xff]
        %v224 = vld [vmem:[%s3] sm:$0xff]
        %v225 = vld [vmem:[%s3 + $0x8] sm:$0xff]
        %v226 = vld [vmem:[%s3 + $0x10] sm:$0xff]
        %v227 = vld [vmem:[%s3 + $0x18] sm:$0xff]
        %v228 = vld [vmem:[%s3 + $0x20] sm:$0xff]
        %v229 = vld [vmem:[%s3 + $0x28] sm:$0xff]
        %v230 = vld [vmem:[%s3 + $0x30] sm:$0xff]
        %v231 = vld [vmem:[%s3 + $0x38] sm:$0xff]
        %v232 = vld [vmem:[%s3 + $0x40] sm:$0xff]
        %v233 = vld [vmem:[%s3 + $0x48] sm:$0xff]
        %v234 = vld [vmem:[%s3 + $0x50] sm:$0xff]
        %v235 = vld [vmem:[%s3 + $0x58] sm:$0xff]
        %v236 = vld [vmem:[%s3 + $0x60] sm:$0xff]
        %v237 = vld [vmem:[%s3 + $0x68] sm:$0xff]
        %v238 = vld [vmem:[%s3 + $0x70] sm:$0xff]
        %v239 = vld [vmem:[%s3 + $0x78] sm:$0xff]
        %vm240 = vcmask 261120
        %v242 = vsel %vm240, %v216, 0
        %v245 = vsel %vm240, %v217, 0
        %247 = vmatprep.subr.mxu0 0.0
        %248 = vmatpush1.msra.mxu0 %v220
        %249 = vmatprep.subr.mxu0 0.0
        %250 = vmatpush1.msra.mxu0 %v221
        %251 = vmatprep.subr.mxu0 0.0
        %252 = vmatpush1.msra.mxu0 %v222
        %253 = vmatprep.subr.mxu0 0.0
        %254 = vmatpush1.msra.mxu0 %v223
        %255 = vmatprep.subr.mxu0 0.0
        %256 = vmatpush1.msra.mxu0 0.0
        %257 = vmatprep.subr.mxu0 0.0
        %258 = vmatpush1.msra.mxu0 0.0
        %259 = vmatprep.subr.mxu0 0.0
        %260 = vmatpush1.msra.mxu0 0.0
        %261 = vmatprep.subr.mxu0 0.0
        %262 = vmatpush1.msra.mxu0 0.0
        %263 = vmatprep.subr.mxu0 0.0
        %264 = vmatpush1.msra.mxu0 0.0
        %265 = vmatprep.subr.mxu0 0.0
        %266 = vmatpush1.msra.mxu0 0.0
        %267 = vmatprep.subr.mxu0 0.0
        %268 = vmatpush1.msra.mxu0 0.0
        %269 = vmatprep.subr.mxu0 0.0
        %270 = vmatpush1.msra.mxu0 0.0
        %271 = vmatprep.subr.mxu0 0.0
        %272 = vmatpush1.msra.mxu0 0.0
        %273 = vmatprep.subr.mxu0 0.0
        %274 = vmatpush1.msra.mxu0 0.0
        %275 = vmatprep.subr.mxu0 0.0
        %276 = vmatpush1.msra.mxu0 0.0
        %277 = vmatprep.subr.mxu0 0.0
        %278 = vmatpush1.msra.mxu0 0.0
        %279 = vmatprep.subr.mxu0 0.0
        %280 = vmatpush1.msra.mxu0 0.0
        %281 = vmatprep.subr.mxu0 0.0
        %282 = vmatpush1.msra.mxu0 0.0
        %283 = vmatprep.subr.mxu0 0.0
        %284 = vmatpush1.msra.mxu0 0.0
        %285 = vmatprep.subr.mxu0 0.0
        %286 = vmatpush1.msra.mxu0 0.0
        %287 = vmatprep.subr.mxu0 0.0
        %288 = vmatpush1.msra.mxu0 0.0
        %289 = vmatprep.subr.mxu0 0.0
        %290 = vmatpush1.msra.mxu0 0.0
        %291 = vmatprep.subr.mxu0 0.0
        %292 = vmatpush1.msra.mxu0 0.0
        %293 = vmatprep.subr.mxu0 0.0
        %294 = vmatpush1.msra.mxu0 0.0
        %295 = vmatprep.subr.mxu0 0.0
        %296 = vmatpush1.msra.mxu0 0.0
        %297 = vmatprep.subr.mxu0 0.0
        %298 = vmatpush1.msra.mxu0 0.0
        %299 = vmatprep.subr.mxu0 0.0
        %300 = vmatpush1.msra.mxu0 0.0
        %301 = vmatprep.subr.mxu0 0.0
        %302 = vmatpush1.msra.mxu0 0.0
        %303 = vmatprep.subr.mxu0 0.0
        %304 = vmatpush1.msra.mxu0 0.0
        %305 = vmatprep.subr.mxu0 0.0
        %306 = vmatpush1.msra.mxu0 0.0
        %307 = vmatprep.subr.mxu0 0.0
        %308 = vmatpush1.msra.mxu0 0.0
        %309 = vmatprep.subr.mxu0 0.0
        %310 = vmatpush1.msra.mxu0 0.0
        %311 = vmatprep.mubr.f32.mxu0 0.0
        %312 = vmatmul.mubr.f32.gmra.mrb[0].mxu0 %v242
        %v313 = vpop.f32.mrb[0].mxu0
        %v314 = vadd.f32 0.0, %v313
        %v315 = vpop.f32.mrb[0].mxu0
        %316 = vmatprep.mubr.f32.mxu0 0.0
        %317 = vmatmul.mubr.f32.gmra.mrb[0].mxu0 %v245
        %v318 = vpop.f32.mrb[0].mxu0
        %v319 = vadd.f32 0.0, %v318
        %v320 = vpop.f32.mrb[0].mxu0
        %321 = vdwg.mxu0
        %322 = vmatprep.subr.mxu0 0.0
        %323 = vmatpush1.msra.mxu0 %v224
        %324 = vmatprep.subr.mxu0 0.0
        %325 = vmatpush1.msra.mxu0 %v225
        %326 = vmatprep.subr.mxu0 0.0
        %327 = vmatpush1.msra.mxu0 %v226
        %328 = vmatprep.subr.mxu0 0.0
        %329 = vmatpush1.msra.mxu0 %v227
        %330 = vmatprep.subr.mxu0 0.0
        %331 = vmatpush1.msra.mxu0 %v228
        %332 = vmatprep.subr.mxu0 0.0
        %333 = vmatpush1.msra.mxu0 %v229
        %334 = vmatprep.subr.mxu0 0.0
        %335 = vmatpush1.msra.mxu0 %v230
        %336 = vmatprep.subr.mxu0 0.0
        %337 = vmatpush1.msra.mxu0 %v231
        %338 = vmatprep.subr.mxu0 0.0
        %339 = vmatpush1.msra.mxu0 %v232
        %340 = vmatprep.subr.mxu0 0.0
        %341 = vmatpush1.msra.mxu0 %v233
        %342 = vmatprep.subr.mxu0 0.0
        %343 = vmatpush1.msra.mxu0 %v234
        %344 = vmatprep.subr.mxu0 0.0
        %345 = vmatpush1.msra.mxu0 %v235
        %346 = vmatprep.subr.mxu0 0.0
        %347 = vmatpush1.msra.mxu0 %v236
        %348 = vmatprep.subr.mxu0 0.0
        %349 = vmatpush1.msra.mxu0 %v237
        %350 = vmatprep.subr.mxu0 0.0
        %351 = vmatpush1.msra.mxu0 %v238
        %352 = vmatprep.subr.mxu0 0.0
        %353 = vmatpush1.msra.mxu0 %v239
        %354 = vmatprep.subr.mxu0 0.0
        %355 = vmatpush1.msra.mxu0 0.0
        %356 = vmatprep.subr.mxu0 0.0
        %357 = vmatpush1.msra.mxu0 0.0
        %358 = vmatprep.subr.mxu0 0.0
        %359 = vmatpush1.msra.mxu0 0.0
        %360 = vmatprep.subr.mxu0 0.0
        %361 = vmatpush1.msra.mxu0 0.0
        %362 = vmatprep.subr.mxu0 0.0
        %363 = vmatpush1.msra.mxu0 0.0
        %364 = vmatprep.subr.mxu0 0.0
        %365 = vmatpush1.msra.mxu0 0.0
        %366 = vmatprep.subr.mxu0 0.0
        %367 = vmatpush1.msra.mxu0 0.0
        %368 = vmatprep.subr.mxu0 0.0
        %369 = vmatpush1.msra.mxu0 0.0
        %370 = vmatprep.subr.mxu0 0.0
        %371 = vmatpush1.msra.mxu0 0.0
        %372 = vmatprep.subr.mxu0 0.0
        %373 = vmatpush1.msra.mxu0 0.0
        %374 = vmatprep.subr.mxu0 0.0
        %375 = vmatpush1.msra.mxu0 0.0
        %376 = vmatprep.subr.mxu0 0.0
        %377 = vmatpush1.msra.mxu0 0.0
        %378 = vmatprep.subr.mxu0 0.0
        %379 = vmatpush1.msra.mxu0 0.0
        %380 = vmatprep.subr.mxu0 0.0
        %381 = vmatpush1.msra.mxu0 0.0
        %382 = vmatprep.subr.mxu0 0.0
        %383 = vmatpush1.msra.mxu0 0.0
        %384 = vmatprep.subr.mxu0 0.0
        %385 = vmatpush1.msra.mxu0 0.0
        %386 = vmatprep.mubr.f32.mxu0 0.0
        %387 = vmatmul.mubr.f32.gmra.mrb[0].mxu0 %v314
        %v388 = vpop.f32.mrb[0].mxu0
        %v389 = vadd.f32 0.0, %v388
        %v390 = vpop.f32.mrb[0].mxu0
        %391 = vmatprep.mubr.f32.mxu0 0.0
        %392 = vmatmul.mubr.f32.gmra.mrb[0].mxu0 %v319
        %v393 = vpop.f32.mrb[0].mxu0
        %v394 = vadd.f32 0.0, %v393
        %v395 = vpop.f32.mrb[0].mxu0
        %396 = vdwg.mxu0
        %399 = vrot.lane.b32.xlu0 %v389, 124
        %v400 = vpop.permute.xlu0 %399
        %401 = vrot.lane.b32.xlu0 %v394, 124
        %v402 = vpop.permute.xlu0 %401
        %405 = vxpose.xlu0.b32.start [1/16] %v400, 128
        %406 = vxpose.xlu0.b32.cont [2/16] %v402, 128
        %407 = vxpose.xlu0.b32.cont [3/16] 0.0, 128
        %408 = vxpose.xlu0.b32.cont [4/16] 0.0, 128
        %409 = vxpose.xlu0.b32.cont [5/16] 0.0, 128
        %410 = vxpose.xlu0.b32.cont [6/16] 0.0, 128
        %411 = vxpose.xlu0.b32.cont [7/16] 0.0, 128
        %412 = vxpose.xlu0.b32.cont [8/16] 0.0, 128
        %413 = vxpose.xlu0.b32.cont [9/16] 0.0, 128
        %414 = vxpose.xlu0.b32.cont [10/16] 0.0, 128
        %415 = vxpose.xlu0.b32.cont [11/16] 0.0, 128
        %416 = vxpose.xlu0.b32.cont [12/16] 0.0, 128
        %417 = vxpose.xlu0.b32.cont [13/16] 0.0, 128
        %418 = vxpose.xlu0.b32.cont [14/16] 0.0, 128
        %419 = vxpose.xlu0.b32.cont [15/16] 0.0, 128
        %420 = vxpose.xlu0.b32.end [16/16] 0.0, 128
        %v421 = vpop.trf.xlu0
        %v422 = vpop.trf.xlu0
        %v423 = vpop.trf.xlu0
        %v424 = vpop.trf.xlu0
        %v425 = vpop.trf.xlu0
        %v426 = vpop.trf.xlu0
        %v427 = vpop.trf.xlu0
        %v428 = vpop.trf.xlu0
        %v429 = vpop.trf.xlu0
        %v430 = vpop.trf.xlu0
        %v431 = vpop.trf.xlu0
        %v432 = vpop.trf.xlu0
        %v433 = vpop.trf.xlu0
        %v434 = vpop.trf.xlu0
        %v435 = vpop.trf.xlu0
        %v436 = vpop.trf.xlu0
        %vm437 = vcmp.gt.f32.partialorder %v218, 0.0
        %vm438 = vcmp.gt.f32.partialorder %v219, 0.0
        %v439 = vsel %vm437, 0.0, -9e+15
        %v440 = vsel %vm438, 0.0, -9e+15
        %441 = vset.pattern.permute.xlu0 0
        %442 = vperm.xlu0 %441, %v389
        %v443 = vpop.permute.xlu0 %442
        %445 = vset.pattern.permute.xlu0 0
        %446 = vperm.xlu0 %445, %v394
        %v447 = vpop.permute.xlu0 %446
        %v449 = vlaneseq
        %v450 = vshrl.u32 %v449, 7
        %v451 = vsub.s32 0, %v450
        %v452 = vrot.slane %v421, %v451
        %v453 = vadd.f32 %v443, %v452
        %v454 = vadd.f32 %v447, %v452
        %v455 = vmul.f32 %v453, 0.2
        %v456 = vmul.f32 %v454, 0.2
        %v457 = vmax.f32 %v453, %v455
        %v458 = vmax.f32 %v454, %v456
        %v459 = vadd.f32 %v457, %v439
        %v460 = vadd.f32 %v458, %v440
        %vm461 = vcmask 130048
        %v462 = vsel %vm461, %v459, -inf
        %463 = vmax.xlane.f32.xlu0 %v462
        %v464 = vpop.xlane.xlu0 %463
        %v465 = vsel %vm461, %v460, -inf
        %466 = vmax.xlane.f32.xlu0 %v465
        %v467 = vpop.xlane.xlu0 %466
        %v468 = vsub.f32 %v459, %v464
        %v469 = vsub.f32 %v460, %v467
        %v470 = vmul.f32 %v468, 1.442695
        %v471 = vpow.pop %v470
        %v472 = vmul.f32 %v469, 1.442695
        %v473 = vpow.pop %v472
        %v474 = vsel %vm461, %v471, 0.0
        %475 = vadd.xlane.f32.xlu0 %v474
        %v476 = vpop.xlane.xlu0 %475
        %v477 = vsel %vm461, %v473, 0.0
        %478 = vadd.xlane.f32.xlu0 %v477
        %v479 = vpop.xlane.xlu0 %478
        %v480 = vrcp.pop %v476
        %v481 = vrcp.pop %v479
        %v482 = vmul.f32 %v471, %v480
        %v483 = vmul.f32 %v473, %v481
        %484 = vset.pattern.permute.xlu0 1
        %485 = vperm.xlu0 %484, %v389
        %v486 = vpop.permute.xlu0 %485
        %488 = vset.pattern.permute.xlu0 1
        %489 = vperm.xlu0 %488, %v394
        %v490 = vpop.permute.xlu0 %489
        %v492 = vlaneseq
        %v493 = vshrl.u32 %v492, 7
        %v494 = vsub.s32 1, %v493
        %v495 = vrot.slane %v421, %v494
        %v496 = vadd.f32 %v486, %v495
        %v497 = vadd.f32 %v490, %v495
        %v498 = vmul.f32 %v496, 0.2
        %v499 = vmul.f32 %v497, 0.2
        %v500 = vmax.f32 %v496, %v498
        %v501 = vmax.f32 %v497, %v499
        %v502 = vadd.f32 %v500, %v439
        %v503 = vadd.f32 %v501, %v440
        %v504 = vsel %vm461, %v502, -inf
        %505 = vmax.xlane.f32.xlu0 %v504
        %v506 = vpop.xlane.xlu0 %505
        %v507 = vsel %vm461, %v503, -inf
        %508 = vmax.xlane.f32.xlu0 %v507
        %v509 = vpop.xlane.xlu0 %508
        %v510 = vsub.f32 %v502, %v506
        %v511 = vsub.f32 %v503, %v509
        %v512 = vmul.f32 %v510, 1.442695
        %v513 = vpow.pop %v512
        %v514 = vmul.f32 %v511, 1.442695
        %v515 = vpow.pop %v514
        %v516 = vsel %vm461, %v513, 0.0
        %517 = vadd.xlane.f32.xlu0 %v516
        %v518 = vpop.xlane.xlu0 %517
        %v519 = vsel %vm461, %v515, 0.0
        %520 = vadd.xlane.f32.xlu0 %v519
        %v521 = vpop.xlane.xlu0 %520
        %v522 = vrcp.pop %v518
        %v523 = vrcp.pop %v521
        %v524 = vmul.f32 %v513, %v522
        %v525 = vmul.f32 %v515, %v523
        %528 = vrot.lane.b32.xlu0 %v314, 96
        %v529 = vpop.permute.xlu0 %528
        %530 = vrot.lane.b32.xlu0 %v319, 96
        %v531 = vpop.permute.xlu0 %530
        %v535 = vsel %vm461, %v524, 0
        %v538 = vsel %vm461, %v525, 0
        %540 = vmatprep.subr.mxu0 0.0
        %541 = vmatpush1.msra.mxu0 %v529
        %542 = vmatprep.subr.mxu0 0.0
        %543 = vmatpush1.msra.mxu0 %v531
        %544 = vmatprep.subr.mxu0 0.0
        %545 = vmatpush1.msra.mxu0 0.0
        %546 = vmatprep.subr.mxu0 0.0
        %547 = vmatpush1.msra.mxu0 0.0
        %548 = vmatprep.subr.mxu0 0.0
        %549 = vmatpush1.msra.mxu0 0.0
        %550 = vmatprep.subr.mxu0 0.0
        %551 = vmatpush1.msra.mxu0 0.0
        %552 = vmatprep.subr.mxu0 0.0
        %553 = vmatpush1.msra.mxu0 0.0
        %554 = vmatprep.subr.mxu0 0.0
        %555 = vmatpush1.msra.mxu0 0.0
        %556 = vmatprep.subr.mxu0 0.0
        %557 = vmatpush1.msra.mxu0 0.0
        %558 = vmatprep.subr.mxu0 0.0
        %559 = vmatpush1.msra.mxu0 0.0
        %560 = vmatprep.subr.mxu0 0.0
        %561 = vmatpush1.msra.mxu0 0.0
        %562 = vmatprep.subr.mxu0 0.0
        %563 = vmatpush1.msra.mxu0 0.0
        %564 = vmatprep.subr.mxu0 0.0
        %565 = vmatpush1.msra.mxu0 0.0
        %566 = vmatprep.subr.mxu0 0.0
        %567 = vmatpush1.msra.mxu0 0.0
        %568 = vmatprep.subr.mxu0 0.0
        %569 = vmatpush1.msra.mxu0 0.0
        %570 = vmatprep.subr.mxu0 0.0
        %571 = vmatpush1.msra.mxu0 0.0
        %572 = vmatprep.subr.mxu0 0.0
        %573 = vmatpush1.msra.mxu0 0.0
        %574 = vmatprep.subr.mxu0 0.0
        %575 = vmatpush1.msra.mxu0 0.0
        %576 = vmatprep.subr.mxu0 0.0
        %577 = vmatpush1.msra.mxu0 0.0
        %578 = vmatprep.subr.mxu0 0.0
        %579 = vmatpush1.msra.mxu0 0.0
        %580 = vmatprep.subr.mxu0 0.0
        %581 = vmatpush1.msra.mxu0 0.0
        %582 = vmatprep.subr.mxu0 0.0
        %583 = vmatpush1.msra.mxu0 0.0
        %584 = vmatprep.subr.mxu0 0.0
        %585 = vmatpush1.msra.mxu0 0.0
        %586 = vmatprep.subr.mxu0 0.0
        %587 = vmatpush1.msra.mxu0 0.0
        %588 = vmatprep.subr.mxu0 0.0
        %589 = vmatpush1.msra.mxu0 0.0
        %590 = vmatprep.subr.mxu0 0.0
        %591 = vmatpush1.msra.mxu0 0.0
        %592 = vmatprep.subr.mxu0 0.0
        %593 = vmatpush1.msra.mxu0 0.0
        %594 = vmatprep.subr.mxu0 0.0
        %595 = vmatpush1.msra.mxu0 0.0
        %596 = vmatprep.subr.mxu0 0.0
        %597 = vmatpush1.msra.mxu0 0.0
        %598 = vmatprep.subr.mxu0 0.0
        %599 = vmatpush1.msra.mxu0 0.0
        %600 = vmatprep.subr.mxu0 0.0
        %601 = vmatpush1.msra.mxu0 0.0
        %602 = vmatprep.subr.mxu0 0.0
        %603 = vmatpush1.msra.mxu0 0.0
        %604 = vmatprep.mubr.f32.mxu0 0.0
        %605 = vmatmul.mubr.f32.gmra.mrb[0].mxu0 %v535
        %v606 = vpop.f32.mrb[0].mxu0
        %v607 = vadd.f32 0.0, %v606
        %v608 = vpop.f32.mrb[0].mxu0
        %609 = vmatprep.mubr.f32.mxu0 0.0
        %610 = vmatmul.mubr.f32.gmra.mrb[0].mxu0 %v538
        %v611 = vpop.f32.mrb[0].mxu0
        %v612 = vadd.f32 0.0, %v611
        %v613 = vpop.f32.mrb[0].mxu0
        %614 = vdwg.mxu0
        %v616 = vsel %vm461, %v482, 0
        %v619 = vsel %vm461, %v483, 0
        %621 = vmatprep.subr.mxu0 0.0
        %622 = vmatpush1.msra.mxu0 %v314
        %623 = vmatprep.subr.mxu0 0.0
        %624 = vmatpush1.msra.mxu0 %v319
        %625 = vmatprep.subr.mxu0 0.0
        %626 = vmatpush1.msra.mxu0 0.0
        %627 = vmatprep.subr.mxu0 0.0
        %628 = vmatpush1.msra.mxu0 0.0
        %629 = vmatprep.subr.mxu0 0.0
        %630 = vmatpush1.msra.mxu0 0.0
        %631 = vmatprep.subr.mxu0 0.0
        %632 = vmatpush1.msra.mxu0 0.0
        %633 = vmatprep.subr.mxu0 0.0
        %634 = vmatpush1.msra.mxu0 0.0
        %635 = vmatprep.subr.mxu0 0.0
        %636 = vmatpush1.msra.mxu0 0.0
        %637 = vmatprep.subr.mxu0 0.0
        %638 = vmatpush1.msra.mxu0 0.0
        %639 = vmatprep.subr.mxu0 0.0
        %640 = vmatpush1.msra.mxu0 0.0
        %641 = vmatprep.subr.mxu0 0.0
        %642 = vmatpush1.msra.mxu0 0.0
        %643 = vmatprep.subr.mxu0 0.0
        %644 = vmatpush1.msra.mxu0 0.0
        %645 = vmatprep.subr.mxu0 0.0
        %646 = vmatpush1.msra.mxu0 0.0
        %647 = vmatprep.subr.mxu0 0.0
        %648 = vmatpush1.msra.mxu0 0.0
        %649 = vmatprep.subr.mxu0 0.0
        %650 = vmatpush1.msra.mxu0 0.0
        %651 = vmatprep.subr.mxu0 0.0
        %652 = vmatpush1.msra.mxu0 0.0
        %653 = vmatprep.subr.mxu0 0.0
        %654 = vmatpush1.msra.mxu0 0.0
        %655 = vmatprep.subr.mxu0 0.0
        %656 = vmatpush1.msra.mxu0 0.0
        %657 = vmatprep.subr.mxu0 0.0
        %658 = vmatpush1.msra.mxu0 0.0
        %659 = vmatprep.subr.mxu0 0.0
        %660 = vmatpush1.msra.mxu0 0.0
        %661 = vmatprep.subr.mxu0 0.0
        %662 = vmatpush1.msra.mxu0 0.0
        %663 = vmatprep.subr.mxu0 0.0
        %664 = vmatpush1.msra.mxu0 0.0
        %665 = vmatprep.subr.mxu0 0.0
        %666 = vmatpush1.msra.mxu0 0.0
        %667 = vmatprep.subr.mxu0 0.0
        %668 = vmatpush1.msra.mxu0 0.0
        %669 = vmatprep.subr.mxu0 0.0
        %670 = vmatpush1.msra.mxu0 0.0
        %671 = vmatprep.subr.mxu0 0.0
        %672 = vmatpush1.msra.mxu0 0.0
        %673 = vmatprep.subr.mxu0 0.0
        %674 = vmatpush1.msra.mxu0 0.0
        %675 = vmatprep.subr.mxu0 0.0
        %676 = vmatpush1.msra.mxu0 0.0
        %677 = vmatprep.subr.mxu0 0.0
        %678 = vmatpush1.msra.mxu0 0.0
        %679 = vmatprep.subr.mxu0 0.0
        %680 = vmatpush1.msra.mxu0 0.0
        %681 = vmatprep.subr.mxu0 0.0
        %682 = vmatpush1.msra.mxu0 0.0
        %683 = vmatprep.subr.mxu0 0.0
        %684 = vmatpush1.msra.mxu0 0.0
        %685 = vmatprep.mubr.f32.mxu0 0.0
        %686 = vmatmul.mubr.f32.gmra.mrb[0].mxu0 %v616
        %v687 = vpop.f32.mrb[0].mxu0
        %v688 = vadd.f32 %v607, %v687
        %v689 = vpop.f32.mrb[0].mxu0
        %690 = vmatprep.mubr.f32.mxu0 0.0
        %691 = vmatmul.mubr.f32.gmra.mrb[0].mxu0 %v619
        %v692 = vpop.f32.mrb[0].mxu0
        %v693 = vadd.f32 %v612, %v692
        %v694 = vpop.f32.mrb[0].mxu0
        %695 = vdwg.mxu0
        %696 = vset.pattern.permute.xlu0 2
        %697 = vperm.xlu0 %696, %v389
        %v698 = vpop.permute.xlu0 %697
        %700 = vset.pattern.permute.xlu0 2
        %701 = vperm.xlu0 %700, %v394
        %v702 = vpop.permute.xlu0 %701
        %v704 = vlaneseq
        %v705 = vshrl.u32 %v704, 7
        %v706 = vsub.s32 2, %v705
        %v707 = vrot.slane %v421, %v706
        %v708 = vadd.f32 %v698, %v707
        %v709 = vadd.f32 %v702, %v707
        %v710 = vmul.f32 %v708, 0.2
        %v711 = vmul.f32 %v709, 0.2
        %v712 = vmax.f32 %v708, %v710
        %v713 = vmax.f32 %v709, %v711
        %v714 = vadd.f32 %v712, %v439
        %v715 = vadd.f32 %v713, %v440
        %v716 = vsel %vm461, %v714, -inf
        %717 = vmax.xlane.f32.xlu0 %v716
        %v718 = vpop.xlane.xlu0 %717
        %v719 = vsel %vm461, %v715, -inf
        %720 = vmax.xlane.f32.xlu0 %v719
        %v721 = vpop.xlane.xlu0 %720
        %v722 = vsub.f32 %v714, %v718
        %v723 = vsub.f32 %v715, %v721
        %v724 = vmul.f32 %v722, 1.442695
        %v725 = vpow.pop %v724
        %v726 = vmul.f32 %v723, 1.442695
        %v727 = vpow.pop %v726
        %v728 = vsel %vm461, %v725, 0.0
        %729 = vadd.xlane.f32.xlu0 %v728
        %v730 = vpop.xlane.xlu0 %729
        %v731 = vsel %vm461, %v727, 0.0
        %732 = vadd.xlane.f32.xlu0 %v731
        %v733 = vpop.xlane.xlu0 %732
        %v734 = vrcp.pop %v730
        %v735 = vrcp.pop %v733
        %v736 = vmul.f32 %v725, %v734
        %v737 = vmul.f32 %v727, %v735
        %738 = vrot.lane.b32.xlu0 %v314, 64
        %v739 = vpop.permute.xlu0 %738
        %740 = vrot.lane.b32.xlu0 %v319, 64
        %v741 = vpop.permute.xlu0 %740
        %v745 = vsel %vm461, %v736, 0
        %v748 = vsel %vm461, %v737, 0
        %750 = vmatprep.subr.mxu0 0.0
        %751 = vmatpush1.msra.mxu0 %v739
        %752 = vmatprep.subr.mxu0 0.0
        %753 = vmatpush1.msra.mxu0 %v741
        %754 = vmatprep.subr.mxu0 0.0
        %755 = vmatpush1.msra.mxu0 0.0
        %756 = vmatprep.subr.mxu0 0.0
        %757 = vmatpush1.msra.mxu0 0.0
        %758 = vmatprep.subr.mxu0 0.0
        %759 = vmatpush1.msra.mxu0 0.0
        %760 = vmatprep.subr.mxu0 0.0
        %761 = vmatpush1.msra.mxu0 0.0
        %762 = vmatprep.subr.mxu0 0.0
        %763 = vmatpush1.msra.mxu0 0.0
        %764 = vmatprep.subr.mxu0 0.0
        %765 = vmatpush1.msra.mxu0 0.0
        %766 = vmatprep.subr.mxu0 0.0
        %767 = vmatpush1.msra.mxu0 0.0
        %768 = vmatprep.subr.mxu0 0.0
        %769 = vmatpush1.msra.mxu0 0.0
        %770 = vmatprep.subr.mxu0 0.0
        %771 = vmatpush1.msra.mxu0 0.0
        %772 = vmatprep.subr.mxu0 0.0
        %773 = vmatpush1.msra.mxu0 0.0
        %774 = vmatprep.subr.mxu0 0.0
        %775 = vmatpush1.msra.mxu0 0.0
        %776 = vmatprep.subr.mxu0 0.0
        %777 = vmatpush1.msra.mxu0 0.0
        %778 = vmatprep.subr.mxu0 0.0
        %779 = vmatpush1.msra.mxu0 0.0
        %780 = vmatprep.subr.mxu0 0.0
        %781 = vmatpush1.msra.mxu0 0.0
        %782 = vmatprep.subr.mxu0 0.0
        %783 = vmatpush1.msra.mxu0 0.0
        %784 = vmatprep.subr.mxu0 0.0
        %785 = vmatpush1.msra.mxu0 0.0
        %786 = vmatprep.subr.mxu0 0.0
        %787 = vmatpush1.msra.mxu0 0.0
        %788 = vmatprep.subr.mxu0 0.0
        %789 = vmatpush1.msra.mxu0 0.0
        %790 = vmatprep.subr.mxu0 0.0
        %791 = vmatpush1.msra.mxu0 0.0
        %792 = vmatprep.subr.mxu0 0.0
        %793 = vmatpush1.msra.mxu0 0.0
        %794 = vmatprep.subr.mxu0 0.0
        %795 = vmatpush1.msra.mxu0 0.0
        %796 = vmatprep.subr.mxu0 0.0
        %797 = vmatpush1.msra.mxu0 0.0
        %798 = vmatprep.subr.mxu0 0.0
        %799 = vmatpush1.msra.mxu0 0.0
        %800 = vmatprep.subr.mxu0 0.0
        %801 = vmatpush1.msra.mxu0 0.0
        %802 = vmatprep.subr.mxu0 0.0
        %803 = vmatpush1.msra.mxu0 0.0
        %804 = vmatprep.subr.mxu0 0.0
        %805 = vmatpush1.msra.mxu0 0.0
        %806 = vmatprep.subr.mxu0 0.0
        %807 = vmatpush1.msra.mxu0 0.0
        %808 = vmatprep.subr.mxu0 0.0
        %809 = vmatpush1.msra.mxu0 0.0
        %810 = vmatprep.subr.mxu0 0.0
        %811 = vmatpush1.msra.mxu0 0.0
        %812 = vmatprep.subr.mxu0 0.0
        %813 = vmatpush1.msra.mxu0 0.0
        %814 = vmatprep.mubr.f32.mxu0 0.0
        %815 = vmatmul.mubr.f32.gmra.mrb[0].mxu0 %v745
        %v816 = vpop.f32.mrb[0].mxu0
        %v817 = vadd.f32 0.0, %v816
        %v818 = vpop.f32.mrb[0].mxu0
        %819 = vmatprep.mubr.f32.mxu0 0.0
        %820 = vmatmul.mubr.f32.gmra.mrb[0].mxu0 %v748
        %v821 = vpop.f32.mrb[0].mxu0
        %v822 = vadd.f32 0.0, %v821
        %v823 = vpop.f32.mrb[0].mxu0
        %824 = vdwg.mxu0
        %v825 = vadd.f32 %v688, %v817
        %v826 = vadd.f32 %v693, %v822
        %827 = vset.pattern.permute.xlu0 3
        %828 = vperm.xlu0 %827, %v389
        %v829 = vpop.permute.xlu0 %828
        %831 = vset.pattern.permute.xlu0 3
        %832 = vperm.xlu0 %831, %v394
        %v833 = vpop.permute.xlu0 %832
        %v835 = vlaneseq
        %v836 = vshrl.u32 %v835, 7
        %v837 = vsub.s32 3, %v836
        %v838 = vrot.slane %v421, %v837
        %v839 = vadd.f32 %v829, %v838
        %v840 = vadd.f32 %v833, %v838
        %v841 = vmul.f32 %v839, 0.2
        %v842 = vmul.f32 %v840, 0.2
        %v843 = vmax.f32 %v839, %v841
        %v844 = vmax.f32 %v840, %v842
        %v845 = vadd.f32 %v843, %v439
        %v846 = vadd.f32 %v844, %v440
        %v847 = vsel %vm461, %v845, -inf
        %848 = vmax.xlane.f32.xlu0 %v847
        %v849 = vpop.xlane.xlu0 %848
        %v850 = vsel %vm461, %v846, -inf
        %851 = vmax.xlane.f32.xlu0 %v850
        %v852 = vpop.xlane.xlu0 %851
        %v853 = vsub.f32 %v845, %v849
        %v854 = vsub.f32 %v846, %v852
        %v855 = vmul.f32 %v853, 1.442695
        %v856 = vpow.pop %v855
        %v857 = vmul.f32 %v854, 1.442695
        %v858 = vpow.pop %v857
        %v859 = vsel %vm461, %v856, 0.0
        %860 = vadd.xlane.f32.xlu0 %v859
        %v861 = vpop.xlane.xlu0 %860
        %v862 = vsel %vm461, %v858, 0.0
        %863 = vadd.xlane.f32.xlu0 %v862
        %v864 = vpop.xlane.xlu0 %863
        %v865 = vrcp.pop %v861
        %v866 = vrcp.pop %v864
        %v867 = vmul.f32 %v856, %v865
        %v868 = vmul.f32 %v858, %v866
        %869 = vrot.lane.b32.xlu0 %v314, 32
        %v870 = vpop.permute.xlu0 %869
        %871 = vrot.lane.b32.xlu0 %v319, 32
        %v872 = vpop.permute.xlu0 %871
        %v876 = vsel %vm461, %v867, 0
        %v879 = vsel %vm461, %v868, 0
        %881 = vmatprep.subr.mxu0 0.0
        %882 = vmatpush1.msra.mxu0 %v870
        %883 = vmatprep.subr.mxu0 0.0
        %884 = vmatpush1.msra.mxu0 %v872
        %885 = vmatprep.subr.mxu0 0.0
        %886 = vmatpush1.msra.mxu0 0.0
        %887 = vmatprep.subr.mxu0 0.0
        %888 = vmatpush1.msra.mxu0 0.0
        %889 = vmatprep.subr.mxu0 0.0
        %890 = vmatpush1.msra.mxu0 0.0
        %891 = vmatprep.subr.mxu0 0.0
        %892 = vmatpush1.msra.mxu0 0.0
        %893 = vmatprep.subr.mxu0 0.0
        %894 = vmatpush1.msra.mxu0 0.0
        %895 = vmatprep.subr.mxu0 0.0
        %896 = vmatpush1.msra.mxu0 0.0
        %897 = vmatprep.subr.mxu0 0.0
        %898 = vmatpush1.msra.mxu0 0.0
        %899 = vmatprep.subr.mxu0 0.0
        %900 = vmatpush1.msra.mxu0 0.0
        %901 = vmatprep.subr.mxu0 0.0
        %902 = vmatpush1.msra.mxu0 0.0
        %903 = vmatprep.subr.mxu0 0.0
        %904 = vmatpush1.msra.mxu0 0.0
        %905 = vmatprep.subr.mxu0 0.0
        %906 = vmatpush1.msra.mxu0 0.0
        %907 = vmatprep.subr.mxu0 0.0
        %908 = vmatpush1.msra.mxu0 0.0
        %909 = vmatprep.subr.mxu0 0.0
        %910 = vmatpush1.msra.mxu0 0.0
        %911 = vmatprep.subr.mxu0 0.0
        %912 = vmatpush1.msra.mxu0 0.0
        %913 = vmatprep.subr.mxu0 0.0
        %914 = vmatpush1.msra.mxu0 0.0
        %915 = vmatprep.subr.mxu0 0.0
        %916 = vmatpush1.msra.mxu0 0.0
        %917 = vmatprep.subr.mxu0 0.0
        %918 = vmatpush1.msra.mxu0 0.0
        %919 = vmatprep.subr.mxu0 0.0
        %920 = vmatpush1.msra.mxu0 0.0
        %921 = vmatprep.subr.mxu0 0.0
        %922 = vmatpush1.msra.mxu0 0.0
        %923 = vmatprep.subr.mxu0 0.0
        %924 = vmatpush1.msra.mxu0 0.0
        %925 = vmatprep.subr.mxu0 0.0
        %926 = vmatpush1.msra.mxu0 0.0
        %927 = vmatprep.subr.mxu0 0.0
        %928 = vmatpush1.msra.mxu0 0.0
        %929 = vmatprep.subr.mxu0 0.0
        %930 = vmatpush1.msra.mxu0 0.0
        %931 = vmatprep.subr.mxu0 0.0
        %932 = vmatpush1.msra.mxu0 0.0
        %933 = vmatprep.subr.mxu0 0.0
        %934 = vmatpush1.msra.mxu0 0.0
        %935 = vmatprep.subr.mxu0 0.0
        %936 = vmatpush1.msra.mxu0 0.0
        %937 = vmatprep.subr.mxu0 0.0
        %938 = vmatpush1.msra.mxu0 0.0
        %939 = vmatprep.subr.mxu0 0.0
        %940 = vmatpush1.msra.mxu0 0.0
        %941 = vmatprep.subr.mxu0 0.0
        %942 = vmatpush1.msra.mxu0 0.0
        %943 = vmatprep.subr.mxu0 0.0
        %944 = vmatpush1.msra.mxu0 0.0
        %945 = vmatprep.mubr.f32.mxu0 0.0
        %946 = vmatmul.mubr.f32.gmra.mrb[0].mxu0 %v876
        %v947 = vpop.f32.mrb[0].mxu0
        %v948 = vadd.f32 0.0, %v947
        %v949 = vpop.f32.mrb[0].mxu0
        %950 = vmatprep.mubr.f32.mxu0 0.0
        %951 = vmatmul.mubr.f32.gmra.mrb[0].mxu0 %v879
        %v952 = vpop.f32.mrb[0].mxu0
        %v953 = vadd.f32 0.0, %v952
        %v954 = vpop.f32.mrb[0].mxu0
        %955 = vdwg.mxu0
        %v956 = vadd.f32 %v825, %v948
        %v957 = vadd.f32 %v826, %v953
        %v958 = vmul.f32 %v956, 0.25
        %v959 = vmul.f32 %v957, 0.25
        %vm960 = vcmp.gt.f32.partialorder %v958, 0.0
        %vm961 = vcmp.gt.f32.partialorder %v959, 0.0
        %v962 = vmin.f32 %v958, 0.0
        %v963 = vmin.f32 %v959, 0.0
        %v964 = vmul.f32 %v962, 1.442695
        %v965 = vpow.pop %v964
        %v966 = vmul.f32 %v963, 1.442695
        %v967 = vpow.pop %v966
        %v968 = vsub.f32 %v965, 1.0
        %v969 = vsub.f32 %v967, 1.0
        %v970 = vsel %vm960, %v958, %v968
        %v971 = vsel %vm961, %v959, %v969
        %972 = vst.msk [vmem:[%s205] sm:$0xff] %vm240, %v970
        %973 = vst.msk [vmem:[%s205 + $0x8] sm:$0xff] %vm240, %v971
        %s974 = sand.u32 %s120, 1
        %s975 = scalar_lea.sflag [#allocation3], %s974
        %s976 = sand.u32 %s120, 1
        %s977 = smul.addr %s976, 16
        %s978 = scalar_lea.vmem [#allocation2], %s977
        // Predicated region
        $region37: #{gat_layer.1} parent=35 // pred_check
          %p979 = pneg %p130
        $region38: #{gat_layer.1} parent=35 // pred_check_branch
          %981 = sbr.rel (%p979) target = $region40
        $region39: #{gat_layer.1} parent=35 // pred_region
          %s983 = ssub.s32 256, 256
          %984 = vsyncadd %s975, %s983
          %s985 = smul.addr %s18, 2
          %s986 = smul.addr %s985, 128
          %s987 = scalar_lea.hbm %s4, %s986
          %s988 = sshll.u32 %s978, 4
          %s989 = int_to_ptr.vmem [resolvable:$true] %s988
          %994 = dma.vmem_to_hbm [thread:$0]  %s989, 256, %s987, %s975, 128, 128, 8
        $region40: #{gat_layer.1} parent=35 // pred_fallthru
          _
      $region36: #{gat_layer.1} parent=5 // pred_fallthru
        _
      %p995 = scmp.le.s32.totalorder 2, %s13
      // Predicated region
      $region41: #{gat_layer.1} parent=5 // pred_check
        %p996 = pneg %p995
      $region42: #{gat_layer.1} parent=5 // pred_check_branch
        %998 = sbr.rel (%p996) target = $region44
      $region43: #{gat_layer.1} parent=5 // pred_region
        %s999 = ssub.s32 %s13, 2
        // Predicated region
        $region45: #{gat_layer.1} parent=43 // pred_check
          %p1000 = pneg %p136
        $region46: #{gat_layer.1} parent=43 // pred_check_branch
          %1002 = sbr.rel (%p1000) target = $region48
        $region47: #{gat_layer.1} parent=43 // pred_region
          %s1003 = sand.u32 %s121, 1
          %s1004 = scalar_lea.sflag [#allocation3], %s1003
          %s1005 = sand.u32 %s121, 1
          %s1006 = smul.addr %s1005, 16
          %s1007 = scalar_lea.vmem [#allocation2], %s1006
          %1008 = dma.done %s1004, 256
        $region48: #{gat_layer.1} parent=43 // pred_fallthru
          _
      $region44: #{gat_layer.1} parent=5 // pred_fallthru
        _
    $region6: #{gat_layer.1} parent=1 // loop_footer
      %s17 = sadd.s32 1, %s13
    $region7: #{gat_layer.1} parent=1 // loop_footer_branch
      %12 = sbr.rel target = $region3
    $region8: #{gat_layer.1} parent=1 // loop_exit
      _
    %1009 = vsyncpa [#allocation3], 1
    %s1010 = scalar_lea.sflag [#allocation3], 1
    %1011 = vsyncpa %s1010, 1

</llo_original>
